<compile_context>
chip_gen: v5e
topology: v5e:2x2
jax: 0.10.0
libtpu: 0.0.40
codegen_flags: <defaults>
</compile_context>

<pallas_src>
import functools

import jax
import jax.numpy as jnp
import numpy as np
from jax import lax
from jax.experimental import pallas as pl
from jax.experimental.pallas import tpu as pltpu

_LANE = 128


def _high_avrg_kernel(x_ref, remb_ref, opt_ref,
                      w1_ref, b1_ref, w2_ref, b2_ref, wh_ref, bh_ref, g_ref,
                      out_ref, *, n_options, n_pre_options):
    """Fused MPM (MLP) + head + per-row gather over the pre-option axis (lane-dense output)."""
    # --- MPM layer 1: bf16 MXU matmul, f32 accumulation; range-embedding + bias add in f32 ---
    h1 = jnp.dot(x_ref[...], w1_ref[...], preferred_element_type=jnp.float32)   # [TB, H] f32
    h1 = jnp.maximum(h1 + remb_ref[...] + b1_ref[...], 0.0)

    # --- MPM layer 2 ---
    h2 = jnp.dot(h1.astype(jnp.bfloat16), w2_ref[...], preferred_element_type=jnp.float32)
    h2 = jnp.maximum(h2 + b2_ref[...], 0.0)

    # --- head: Linear(H -> P*C) ---
    logits = jnp.dot(h2.astype(jnp.bfloat16), wh_ref[...],
                     preferred_element_type=jnp.float32) + bh_ref[...]          # [TB, P*C] f32

    # --- per-row gather along the pre-option axis (torch .gather(dim=-2)) ---
    # column j of `logits` corresponds to (pre_option = j // C, option = j % C); select the
    # columns of the chosen pre-option with a cheap VPU mask (no integer division needed),
    # then fold the pre-option stride AND pad to a lane-dense [TB, 128] tile in one small matmul:
    #   G[j, c] = 1 iff (j % C) == c  (c < C), 0 otherwise  ->  out[b, c] = logits[b, opt_b*C + c]
    # NOTE: out-of-range option_idxs (<0 or >= P) give an all-zero mask -> zero output row
    # (torch.gather would raise); inputs are assumed valid.
    opt = opt_ref[...]                                                          # [TB, 1] int32
    col = lax.broadcasted_iota(jnp.int32, (1, n_pre_options * n_options), 1)    # [1, P*C]
    base = opt * n_options
    mask = jnp.logical_and(col >= base, col < base + n_options)                 # [TB, P*C]
    masked = jnp.where(mask, logits, 0.0)                                       # exact f32 gather
    out_ref[...] = jnp.dot(masked, g_ref[...], preferred_element_type=jnp.float32)


def _pick_batch_tile(batch):
    """Largest multiple-of-8 tile that divides B and leaves >=2 grid steps (megacore on v7x)."""
    for t in (1024, 512, 256, 128, 64, 32, 16, 8):
        if t <= max(8, batch // 2) and batch % t == 0:
            return t
    return batch


def high_avrg_net_forward(pub_obses, range_idxs, option_idxs, params,
                          *, n_options, n_pre_options, batch_tile=None):
    """JAX wrapper: embedding lookup for range_idxs + fused Pallas kernel, lane-dense output."""
    w1_obs, w1_range, b1, w2, b2, wh, bh = params
    B = pub_obses.shape[0]
    C, P = n_options, n_pre_options
    OBS = w1_obs.shape[0]
    H = w2.shape[0]

    # one_hot(range_idx) @ W1_range  ==  row lookup of W1_range  (done once in the wrapper, f32)
    range_emb = jnp.take(w1_range.astype(jnp.float32), range_idxs.astype(jnp.int32), axis=0)  # [B, H]
    opt = option_idxs.astype(jnp.int32).reshape(B, 1)

    # bf16 operands for the MXU (halves weight/activation DMA); biases stay f32
    x = pub_obses.astype(jnp.bfloat16)
    w1b = w1_obs.astype(jnp.bfloat16)
    w2b = w2.astype(jnp.bfloat16)
    whb = wh.astype(jnp.bfloat16)
    b1f = b1.reshape(1, H).astype(jnp.float32)
    b2f = b2.reshape(1, H).astype(jnp.float32)
    bhf = bh.reshape(1, P * C).astype(jnp.float32)

    # constant gather/pad matrix: G[j, c] = 1 iff j % C == c  (output padded to a 128-lane multiple)
    out_w = _LANE * pl.cdiv(C, _LANE)
    gmat = np.zeros((P * C, out_w), np.float32)
    gmat[np.arange(P * C), np.arange(P * C) % C] = 1.0
    gmat = jnp.asarray(gmat)

    TB = batch_tile if batch_tile is not None else _pick_batch_tile(B)
    grid = (pl.cdiv(B, TB),)

    kernel = functools.partial(_high_avrg_kernel, n_options=C, n_pre_options=P)

    out_pad = pl.pallas_call(
        kernel,
        out_shape=jax.ShapeDtypeStruct((B, out_w), jnp.float32),
        grid=grid,
        in_specs=[
            pl.BlockSpec((TB, OBS), lambda i: (i, 0)),       # pub_obses (bf16)
            pl.BlockSpec((TB, H), lambda i: (i, 0)),         # range-embedding rows (f32)
            pl.BlockSpec((TB, 1), lambda i: (i, 0)),         # option_idxs (int32)
            pl.BlockSpec((OBS, H), lambda i: (0, 0)),        # w1_obs  (grid-invariant -> stays in VMEM)
            pl.BlockSpec((1, H), lambda i: (0, 0)),          # b1
            pl.BlockSpec((H, H), lambda i: (0, 0)),          # w2
            pl.BlockSpec((1, H), lambda i: (0, 0)),          # b2
            pl.BlockSpec((H, P * C), lambda i: (0, 0)),      # wh
            pl.BlockSpec((1, P * C), lambda i: (0, 0)),      # bh
            pl.BlockSpec((P * C, out_w), lambda i: (0, 0)),  # gather/pad matrix
        ],
        out_specs=pl.BlockSpec((TB, out_w), lambda i: (i, 0)),
        compiler_params=pltpu.CompilerParams(
            dimension_semantics=("parallel",)),              # batch axis shards across TCs on v7x
    )(x, range_emb, opt, w1b, b1f, w2b, b2f, whb, bhf, gmat)

    return out_pad[:, :C]


def _reference(pub_obses, range_idxs, option_idxs, w1, b1, w2, b2, wh, bh,
               *, n_ranges, n_options, n_pre_options):
    """Pure-JAX reference mirroring the PyTorch forward (view + gather(dim=-2) + squeeze),
    with the same bf16-matmul / f32-accumulate arithmetic as the kernel."""
    obs_dim = pub_obses.shape[1]
    w1_obs, w1_range = w1[:obs_dim], w1[obs_dim:]
    oh = jax.nn.one_hot(range_idxs, n_ranges, dtype=jnp.float32)
    h1 = jnp.dot(pub_obses.astype(jnp.bfloat16), w1_obs.astype(jnp.bfloat16),
                 preferred_element_type=jnp.float32)
    h1 = jnp.maximum(h1 + oh @ w1_range + b1, 0.0)
    h2 = jnp.dot(h1.astype(jnp.bfloat16), w2.astype(jnp.bfloat16),
                 preferred_element_type=jnp.float32)
    h2 = jnp.maximum(h2 + b2, 0.0)
    y = jnp.dot(h2.astype(jnp.bfloat16), wh.astype(jnp.bfloat16),
                preferred_element_type=jnp.float32) + bh
    y = y.reshape(-1, n_pre_options, n_options)
    ind = option_idxs.astype(jnp.int32).reshape(-1, 1, 1)
    return jnp.take_along_axis(y, ind, axis=1).squeeze(1)


if __name__ == "__main__":
    # Small, deterministic config consistent with the module's shape logic:
    B = 16          # batch (>= 2 batch tiles -> exercises pipelining / megacore split)
    OBS = 24        # public-observation feature size
    N_RANGES = 6    # range-idx vocabulary (one-hot / embedding rows)
    H = 32          # MPM output_units
    DIM_C = 4       # avrg_net_args.mpm_args.dim_c
    C = DIM_C                  # n_options
    P = DIM_C + 1              # n_pre_options

    key = jax.random.PRNGKey(0)
    k_obs, k_rng, k_opt, k1, k2, k3, k4, k5, k6 = jax.random.split(key, 9)

    pub_obses = jax.random.normal(k_obs, (B, OBS), dtype=jnp.float32)
    range_idxs = jax.random.randint(k_rng, (B,), 0, N_RANGES, dtype=jnp.int32)
    option_idxs = jax.random.randint(k_opt, (B,), 0, P, dtype=jnp.int32)

    d_in = OBS + N_RANGES
    w1 = jax.random.normal(k1, (d_in, H), dtype=jnp.float32) * 0.1   # MPM layer 1 ([obs ‖ one_hot])
    b1 = jax.random.normal(k2, (1, H), dtype=jnp.float32) * 0.1
    w2 = jax.random.normal(k3, (H, H), dtype=jnp.float32) * 0.1      # MPM layer 2
    b2 = jax.random.normal(k4, (1, H), dtype=jnp.float32) * 0.1
    wh = jax.random.normal(k5, (H, P * C), dtype=jnp.float32) * 0.1  # head
    bh = jax.random.normal(k6, (1, P * C), dtype=jnp.float32) * 0.1

    # split W1 into the observation part and the range-index embedding part
    params = (w1[:OBS], w1[OBS:], b1, w2, b2, wh, bh)

    out = high_avrg_net_forward(pub_obses, range_idxs, option_idxs, params,
                                n_options=C, n_pre_options=P)
    out = jax.block_until_ready(out)

    ref = _reference(pub_obses, range_idxs, option_idxs, w1, b1, w2, b2, wh, bh,
                     n_ranges=N_RANGES, n_options=C, n_pre_options=P)
    np.testing.assert_allclose(np.asarray(out), np.asarray(ref), rtol=1e-3, atol=1e-3)
    assert out.shape == (B, C)

    print("KERNEL_OK")
</pallas_src>

<mosaic_0001>
module attributes {stable_mosaic.version = 11 : i64} {
  func.func @_high_avrg_kernel(%arg0: i32, %arg1: memref<8x24xbf16, #tpu.memory_space<vmem>>, %arg2: memref<8x32xf32, #tpu.memory_space<vmem>>, %arg3: memref<8x1xi32, #tpu.memory_space<vmem>>, %arg4: memref<24x32xbf16, #tpu.memory_space<vmem>>, %arg5: memref<1x32xf32, #tpu.memory_space<vmem>>, %arg6: memref<32x32xbf16, #tpu.memory_space<vmem>>, %arg7: memref<1x32xf32, #tpu.memory_space<vmem>>, %arg8: memref<32x20xbf16, #tpu.memory_space<vmem>>, %arg9: memref<1x20xf32, #tpu.memory_space<vmem>>, %arg10: memref<20x128xf32, #tpu.memory_space<vmem>>, %arg11: memref<8x128xf32, #tpu.memory_space<vmem>>) attributes {dimension_semantics = [#tpu.dimension_semantics<parallel>], iteration_bounds = array<i64: 2>, scalar_prefetch = 0 : i64, scratch_operands = 0 : i64, tpu.core_type = #tpu.core_type<tc>, window_params = [{transform_indices = @transform_0, window_bounds = array<i64: 8, 24>}, {transform_indices = @transform_1, window_bounds = array<i64: 8, 32>}, {transform_indices = @transform_2, window_bounds = array<i64: 8, 1>}, {pipeline_mode = #tpu.pipeline_mode<synchronous>, transform_indices = @transform_3, window_bounds = array<i64: 24, 32>}, {pipeline_mode = #tpu.pipeline_mode<synchronous>, transform_indices = @transform_4, window_bounds = array<i64: 1, 32>}, {pipeline_mode = #tpu.pipeline_mode<synchronous>, transform_indices = @transform_5, window_bounds = array<i64: 32, 32>}, {pipeline_mode = #tpu.pipeline_mode<synchronous>, transform_indices = @transform_6, window_bounds = array<i64: 1, 32>}, {pipeline_mode = #tpu.pipeline_mode<synchronous>, transform_indices = @transform_7, window_bounds = array<i64: 32, 20>}, {pipeline_mode = #tpu.pipeline_mode<synchronous>, transform_indices = @transform_8, window_bounds = array<i64: 1, 20>}, {pipeline_mode = #tpu.pipeline_mode<synchronous>, transform_indices = @transform_9, window_bounds = array<i64: 20, 128>}, {transform_indices = @transform_10, window_bounds = array<i64: 8, 128>}]} {
    %c0 = arith.constant 0 : index
    %c0_0 = arith.constant 0 : index
    %0 = vector.load %arg1[%c0, %c0_0] : memref<8x24xbf16, #tpu.memory_space<vmem>>, vector<8x24xbf16>
    %c0_1 = arith.constant 0 : index
    %c0_2 = arith.constant 0 : index
    %1 = vector.load %arg4[%c0_1, %c0_2] : memref<24x32xbf16, #tpu.memory_space<vmem>>, vector<24x32xbf16>
    %cst = arith.constant dense<0.000000e+00> : vector<8x32xf32>
    %2 = tpu.matmul %0, %1, %cst {dimension_numbers = #tpu.dot_dimension_numbers<[1], [0], [0], [1], [0, 0, 1, 1], [], []>} : vector<8x24xbf16>, vector<24x32xbf16>, vector<8x32xf32> -> vector<8x32xf32>
    %c0_3 = arith.constant 0 : index
    %c0_4 = arith.constant 0 : index
    %3 = vector.load %arg2[%c0_3, %c0_4] : memref<8x32xf32, #tpu.memory_space<vmem>>, vector<8x32xf32>
    %4 = arith.addf %2, %3 : vector<8x32xf32>
    %c0_5 = arith.constant 0 : index
    %c0_6 = arith.constant 0 : index
    %5 = vector.load %arg5[%c0_5, %c0_6] : memref<1x32xf32, #tpu.memory_space<vmem>>, vector<1x32xf32>
    %6 = vector.broadcast %5 : vector<1x32xf32> to vector<8x32xf32>
    %7 = arith.addf %4, %6 : vector<8x32xf32>
    %cst_7 = arith.constant 0.000000e+00 : f32
    %8 = vector.broadcast %cst_7 : f32 to vector<8x32xf32>
    %9 = arith.maximumf %7, %8 : vector<8x32xf32>
    %10 = arith.truncf %9 : vector<8x32xf32> to vector<8x32xbf16>
    %c0_8 = arith.constant 0 : index
    %c0_9 = arith.constant 0 : index
    %11 = vector.load %arg6[%c0_8, %c0_9] : memref<32x32xbf16, #tpu.memory_space<vmem>>, vector<32x32xbf16>
    %cst_10 = arith.constant dense<0.000000e+00> : vector<8x32xf32>
    %12 = tpu.matmul %10, %11, %cst_10 {dimension_numbers = #tpu.dot_dimension_numbers<[1], [0], [0], [1], [0, 0, 1, 1], [], []>} : vector<8x32xbf16>, vector<32x32xbf16>, vector<8x32xf32> -> vector<8x32xf32>
    %c0_11 = arith.constant 0 : index
    %c0_12 = arith.constant 0 : index
    %13 = vector.load %arg7[%c0_11, %c0_12] : memref<1x32xf32, #tpu.memory_space<vmem>>, vector<1x32xf32>
    %14 = vector.broadcast %13 : vector<1x32xf32> to vector<8x32xf32>
    %15 = arith.addf %12, %14 : vector<8x32xf32>
    %cst_13 = arith.constant 0.000000e+00 : f32
    %16 = vector.broadcast %cst_13 : f32 to vector<8x32xf32>
    %17 = arith.maximumf %15, %16 : vector<8x32xf32>
    %18 = arith.truncf %17 : vector<8x32xf32> to vector<8x32xbf16>
    %c0_14 = arith.constant 0 : index
    %c0_15 = arith.constant 0 : index
    %19 = vector.load %arg8[%c0_14, %c0_15] : memref<32x20xbf16, #tpu.memory_space<vmem>>, vector<32x20xbf16>
    %cst_16 = arith.constant dense<0.000000e+00> : vector<8x20xf32>
    %20 = tpu.matmul %18, %19, %cst_16 {dimension_numbers = #tpu.dot_dimension_numbers<[1], [0], [0], [1], [0, 0, 1, 1], [], []>} : vector<8x32xbf16>, vector<32x20xbf16>, vector<8x20xf32> -> vector<8x20xf32>
    %c0_17 = arith.constant 0 : index
    %c0_18 = arith.constant 0 : index
    %21 = vector.load %arg9[%c0_17, %c0_18] : memref<1x20xf32, #tpu.memory_space<vmem>>, vector<1x20xf32>
    %22 = vector.broadcast %21 : vector<1x20xf32> to vector<8x20xf32>
    %23 = arith.addf %20, %22 : vector<8x20xf32>
    %c0_19 = arith.constant 0 : index
    %c0_20 = arith.constant 0 : index
    %24 = vector.load %arg3[%c0_19, %c0_20] : memref<8x1xi32, #tpu.memory_space<vmem>>, vector<8x1xi32>
    %25 = tpu.iota {dimensions = array<i32: 1>} : vector<1x20xi32>
    %c4_i32 = arith.constant 4 : i32
    %26 = vector.broadcast %c4_i32 : i32 to vector<8x1xi32>
    %27 = arith.muli %24, %26 : vector<8x1xi32>
    %28 = vector.broadcast %25 : vector<1x20xi32> to vector<8x20xi32>
    %29 = vector.broadcast %27 : vector<8x1xi32> to vector<8x20xi32>
    %30 = arith.cmpi sge, %28, %29 : vector<8x20xi32>
    %c4_i32_21 = arith.constant 4 : i32
    %31 = vector.broadcast %c4_i32_21 : i32 to vector<8x1xi32>
    %32 = arith.addi %27, %31 : vector<8x1xi32>
    %33 = vector.broadcast %25 : vector<1x20xi32> to vector<8x20xi32>
    %34 = vector.broadcast %32 : vector<8x1xi32> to vector<8x20xi32>
    %35 = arith.cmpi slt, %33, %34 : vector<8x20xi32>
    %36 = arith.andi %30, %35 : vector<8x20xi1>
    %cst_22 = arith.constant 0.000000e+00 : f32
    %37 = vector.broadcast %cst_22 : f32 to vector<8x20xf32>
    %38 = arith.select %36, %23, %37 : vector<8x20xi1>, vector<8x20xf32>
    %c0_23 = arith.constant 0 : index
    %c0_24 = arith.constant 0 : index
    %39 = vector.load %arg10[%c0_23, %c0_24] : memref<20x128xf32, #tpu.memory_space<vmem>>, vector<20x128xf32>
    %cst_25 = arith.constant dense<0.000000e+00> : vector<8x128xf32>
    %40 = tpu.matmul %38, %39, %cst_25 {dimension_numbers = #tpu.dot_dimension_numbers<[1], [0], [0], [1], [0, 0, 1, 1], [], []>} : vector<8x20xf32>, vector<20x128xf32>, vector<8x128xf32> -> vector<8x128xf32>
    %c0_26 = arith.constant 0 : index
    %c0_27 = arith.constant 0 : index
    %41 = vector.load %arg11[%c0_26, %c0_27] : memref<8x128xf32, #tpu.memory_space<vmem>>, vector<8x128xf32>
    tpu.vector_store %arg11[%c0_26, %c0_27], %40 {strides = array<i32>} : memref<8x128xf32, #tpu.memory_space<vmem>>, vector<8x128xf32>,
    return
  }
  func.func @transform_0(%arg0: i32) -> (i32, i32) {
    %c0_i32 = arith.constant 0 : i32
    %c0_i32_0 = arith.constant 0 : i32
    return %arg0, %c0_i32 : i32, i32
  }
  func.func @transform_1(%arg0: i32) -> (i32, i32) {
    %c0_i32 = arith.constant 0 : i32
    %c0_i32_0 = arith.constant 0 : i32
    return %arg0, %c0_i32 : i32, i32
  }
  func.func @transform_2(%arg0: i32) -> (i32, i32) {
    %c0_i32 = arith.constant 0 : i32
    %c0_i32_0 = arith.constant 0 : i32
    return %arg0, %c0_i32 : i32, i32
  }
  func.func @transform_3(%arg0: i32) -> (i32, i32) {
    %c0_i32 = arith.constant 0 : i32
    %c0_i32_0 = arith.constant 0 : i32
    %c0_i32_1 = arith.constant 0 : i32
    return %c0_i32, %c0_i32_0 : i32, i32
  }
  func.func @transform_4(%arg0: i32) -> (i32, i32) {
    %c0_i32 = arith.constant 0 : i32
    %c0_i32_0 = arith.constant 0 : i32
    %c0_i32_1 = arith.constant 0 : i32
    return %c0_i32, %c0_i32_0 : i32, i32
  }
  func.func @transform_5(%arg0: i32) -> (i32, i32) {
    %c0_i32 = arith.constant 0 : i32
    %c0_i32_0 = arith.constant 0 : i32
    %c0_i32_1 = arith.constant 0 : i32
    return %c0_i32, %c0_i32_0 : i32, i32
  }
  func.func @transform_6(%arg0: i32) -> (i32, i32) {
    %c0_i32 = arith.constant 0 : i32
    %c0_i32_0 = arith.constant 0 : i32
    %c0_i32_1 = arith.constant 0 : i32
    return %c0_i32, %c0_i32_0 : i32, i32
  }
  func.func @transform_7(%arg0: i32) -> (i32, i32) {
    %c0_i32 = arith.constant 0 : i32
    %c0_i32_0 = arith.constant 0 : i32
    %c0_i32_1 = arith.constant 0 : i32
    return %c0_i32, %c0_i32_0 : i32, i32
  }
  func.func @transform_8(%arg0: i32) -> (i32, i32) {
    %c0_i32 = arith.constant 0 : i32
    %c0_i32_0 = arith.constant 0 : i32
    %c0_i32_1 = arith.constant 0 : i32
    return %c0_i32, %c0_i32_0 : i32, i32
  }
  func.func @transform_9(%arg0: i32) -> (i32, i32) {
    %c0_i32 = arith.constant 0 : i32
    %c0_i32_0 = arith.constant 0 : i32
    %c0_i32_1 = arith.constant 0 : i32
    return %c0_i32, %c0_i32_0 : i32, i32
  }
  func.func @transform_10(%arg0: i32) -> (i32, i32) {
    %c0_i32 = arith.constant 0 : i32
    %c0_i32_0 = arith.constant 0 : i32
    return %arg0, %c0_i32 : i32, i32
  }
}

</mosaic_0001>

<llo_original>
// kernel: tpu_custom_call.1
$region0: #{tpu_custom_call.1}
  #allocation0 [shape = 'u32[]', space=smem, size = 0x4, offset = 0x4, fixed_abs, tag = 'smem constant byte address 0x4 - core index']
  #allocation1 [shape = 'u32[72,128]{1,0:T(1,128)}', space=vmem, size = 0x9000, scoped, tag = 'internal scratch']
  %s0 = inlined_call_operand.hbm [shape: bf16[16,24], index: 0, kind: input, shape index: {}]
  %s1 = inlined_call_operand.hbm [shape: f32[16,32], index: 1, kind: input, shape index: {}]
  %s2 = inlined_call_operand.vmem [shape: s32[16,1], index: 2, kind: input, shape index: {}]
  %s3 = inlined_call_operand.vmem [shape: bf16[24,32], index: 3, kind: input, shape index: {}]
  %s4 = inlined_call_operand.vmem [shape: f32[1,32], index: 4, kind: input, shape index: {}]
  %s5 = inlined_call_operand.hbm [shape: bf16[32,32], index: 5, kind: input, shape index: {}]
  %s6 = inlined_call_operand.vmem [shape: f32[1,32], index: 6, kind: input, shape index: {}]
  %s7 = inlined_call_operand.vmem [shape: bf16[32,20], index: 7, kind: input, shape index: {}]
  %s8 = inlined_call_operand.vmem [shape: f32[1,20], index: 8, kind: input, shape index: {}]
  %s9 = inlined_call_operand.vmem [shape: f32[20,128], index: 9, kind: input, shape index: {}]
  %s10 = inlined_call_operand.hbm [shape: f32[16,128], index: 10, kind: output, shape index: {}]
  %s11 = sld [smem:[#allocation0]]
  $region85: #{tpu_custom_call.1} parent=0
    _
  %s13 = ssub.s32 1, %s11
  %s14 = scalar_select 0, %s13, %s11
  $region1: #{tpu_custom_call.1} parent=0
    #allocation2 [shape = 'u8[4096]{0}', space=vmem, size = 0x1000, scoped, tag = 'input window, operand 0']
    #allocation3 [shape = 's32[2]{0}', space=sflag, size = 0x8, scoped, tag = 'scoped memory for tpu_custom_call.1']
    #allocation4 [shape = 's32[2]{0}', space=sflag, size = 0x8, scoped, tag = 'scoped memory for tpu_custom_call.1']
    #allocation5 [shape = 'u8[8192]{0}', space=vmem, size = 0x2000, scoped, tag = 'input window, operand 1']
    #allocation6 [shape = 's32[2]{0}', space=sflag, size = 0x8, scoped, tag = 'scoped memory for tpu_custom_call.1']
    #allocation7 [shape = 'u8[8192]{0}', space=vmem, size = 0x2000, scoped, tag = 'input window, operand 5, single buffered']
    #allocation8 [shape = 'u8[8192]{0}', space=vmem, size = 0x2000, scoped, tag = 'output window, operand 0']
    %15 = vsyncpa [#allocation3], 0
    %s16 = scalar_lea.sflag [#allocation3], 1
    %17 = vsyncpa %s16, 0
    %18 = vsyncpa [#allocation6], 0
    %s19 = scalar_lea.sflag [#allocation6], 1
    %20 = vsyncpa %s19, 0
    %21 = vsyncpa [#allocation4], 0
    %s22 = scalar_lea.sflag [#allocation4], 1
    %23 = vsyncpa %s22, 0
    loop: start=0, step=1, limit=4
    $region2: #{tpu_custom_call.1} parent=1 // loop_pre_header
      _
    $region3: #{tpu_custom_call.1} parent=1 // loop_header
      %s25 = sphi 0, %s29
      %p26 = scmp.ge.s32.totalorder %s25, 4
      %s35 = sphi 0, %s37
      %s38 = sphi 0, %s35
      %s39 = sphi 0, %s38
      %s55 = sphi 0, %s39
      %s61 = sphi 0, %s63
      %s64 = sphi 0, %s61
      %s65 = sphi 0, %s64
      %s81 = sphi 0, %s65
      %s87 = sphi 0, %s89
      %s90 = sphi 0, %s87
      %s91 = sphi 0, %s90
      %s107 = sphi 0, %s91
      %s111 = sphi 0, %s111
      %s113 = sphi 0, %s111
      %s114 = sphi 0, %s113
      %s128 = sphi 0, %s114
      %s132 = sphi 0, %s132
      %s134 = sphi 0, %s132
      %s135 = sphi 0, %s134
      %s149 = sphi 0, %s135
      %s153 = sphi 0, %s153
      %s155 = sphi 0, %s153
      %s156 = sphi 0, %s155
      %s170 = sphi 0, %s156
      %s174 = sphi 0, %s174
      %s176 = sphi 0, %s174
      %s177 = sphi 0, %s176
      %s191 = sphi 0, %s177
      %s195 = sphi 0, %s195
      %s197 = sphi 0, %s195
      %s198 = sphi 0, %s197
      %s212 = sphi 0, %s198
      %s216 = sphi 0, %s216
      %s218 = sphi 0, %s216
      %s219 = sphi 0, %s218
      %s233 = sphi 0, %s219
      %s237 = sphi 0, %s237
      %s239 = sphi 0, %s237
      %s240 = sphi 0, %s239
      %s254 = sphi 0, %s240
      %s260 = sphi 0, %s262
      %s263 = sphi 0, %s260
      %s264 = sphi 0, %s263
      %s280 = sphi 0, %s264
    $region4: #{tpu_custom_call.1} parent=1 // loop_header_branch
      %28 = sbr.rel (%p26) target = $region8
    $region5: #{tpu_custom_call.1} parent=1 // loop_body
      %s30 = ssub.s32 %s25, 1
      %s31 = ssub.s32 %s25, 2
      %s32 = sadd.s32 %s25, 1
      %s33 = ssub.s32 %s25, %s32
      %p34 = scmp.eq.s32.totalorder %s33, 0
      %s36 = sadd.s32 %s35, 1
      %s37 = scalar_select %p34, %s35, %s36
      %p40 = pneg %p34
      %p41 = scmp.eq.s32.totalorder %s25, 1
      %p42 = por %p40, %p41
      %p43 = scmp.ne.s32.totalorder %s35, %s38
      %p44 = scmp.eq.s32.totalorder %s25, 0
      %p45 = por %p43, %p44
      %p46 = scmp.ne.s32.totalorder %s35, %s38
      %p47 = scmp.eq.s32.totalorder %s30, 1
      %p48 = por %p46, %p47
      %p49 = scmp.ne.s32.totalorder %s38, %s39
      %p50 = scmp.eq.s32.totalorder %s30, 0
      %p51 = por %p49, %p50
      %p52 = scmp.ne.s32.totalorder %s38, %s39
      %p53 = scmp.eq.s32.totalorder %s31, 1
      %p54 = por %p52, %p53
      %p56 = scmp.ne.s32.totalorder %s39, %s55
      %p57 = scmp.eq.s32.totalorder %s31, 0
      %p58 = por %p56, %p57
      %s59 = ssub.s32 %s25, %s32
      %p60 = scmp.eq.s32.totalorder %s59, 0
      %s62 = sadd.s32 %s61, 1
      %s63 = scalar_select %p60, %s61, %s62
      %p66 = pneg %p60
      %p67 = scmp.eq.s32.totalorder %s25, 1
      %p68 = por %p66, %p67
      %p69 = scmp.ne.s32.totalorder %s61, %s64
      %p70 = scmp.eq.s32.totalorder %s25, 0
      %p71 = por %p69, %p70
      %p72 = scmp.ne.s32.totalorder %s61, %s64
      %p73 = scmp.eq.s32.totalorder %s30, 1
      %p74 = por %p72, %p73
      %p75 = scmp.ne.s32.totalorder %s64, %s65
      %p76 = scmp.eq.s32.totalorder %s30, 0
      %p77 = por %p75, %p76
      %p78 = scmp.ne.s32.totalorder %s64, %s65
      %p79 = scmp.eq.s32.totalorder %s31, 1
      %p80 = por %p78, %p79
      %p82 = scmp.ne.s32.totalorder %s65, %s81
      %p83 = scmp.eq.s32.totalorder %s31, 0
      %p84 = por %p82, %p83
      %s85 = ssub.s32 %s25, %s32
      %p86 = scmp.eq.s32.totalorder %s85, 0
      %s88 = sadd.s32 %s87, 1
      %s89 = scalar_select %p86, %s87, %s88
      %p92 = pneg %p86
      %p93 = scmp.eq.s32.totalorder %s25, 1
      %p94 = por %p92, %p93
      %p95 = scmp.ne.s32.totalorder %s87, %s90
      %p96 = scmp.eq.s32.totalorder %s25, 0
      %p97 = por %p95, %p96
      %p98 = scmp.ne.s32.totalorder %s87, %s90
      %p99 = scmp.eq.s32.totalorder %s30, 1
      %p100 = por %p98, %p99
      %p101 = scmp.ne.s32.totalorder %s90, %s91
      %p102 = scmp.eq.s32.totalorder %s30, 0
      %p103 = por %p101, %p102
      %p104 = scmp.ne.s32.totalorder %s90, %s91
      %p105 = scmp.eq.s32.totalorder %s31, 1
      %p106 = por %p104, %p105
      %p108 = scmp.ne.s32.totalorder %s91, %s107
      %p109 = scmp.eq.s32.totalorder %s31, 0
      %p110 = por %p108, %p109
      %s112 = sadd.s32 %s111, 1
      %p115 = scmp.eq.s32.totalorder %s25, 1
      %p116 = scmp.ne.s32.totalorder %s111, %s113
      %p117 = scmp.eq.s32.totalorder %s25, 0
      %p118 = por %p116, %p117
      %p119 = scmp.ne.s32.totalorder %s111, %s113
      %p120 = scmp.eq.s32.totalorder %s30, 1
      %p121 = por %p119, %p120
      %p122 = scmp.ne.s32.totalorder %s113, %s114
      %p123 = scmp.eq.s32.totalorder %s30, 0
      %p124 = por %p122, %p123
      %p125 = scmp.ne.s32.totalorder %s113, %s114
      %p126 = scmp.eq.s32.totalorder %s31, 1
      %p127 = por %p125, %p126
      %p129 = scmp.ne.s32.totalorder %s114, %s128
      %p130 = scmp.eq.s32.totalorder %s31, 0
      %p131 = por %p129, %p130
      %s133 = sadd.s32 %s132, 1
      %p136 = scmp.eq.s32.totalorder %s25, 1
      %p137 = scmp.ne.s32.totalorder %s132, %s134
      %p138 = scmp.eq.s32.totalorder %s25, 0
      %p139 = por %p137, %p138
      %p140 = scmp.ne.s32.totalorder %s132, %s134
      %p141 = scmp.eq.s32.totalorder %s30, 1
      %p142 = por %p140, %p141
      %p143 = scmp.ne.s32.totalorder %s134, %s135
      %p144 = scmp.eq.s32.totalorder %s30, 0
      %p145 = por %p143, %p144
      %p146 = scmp.ne.s32.totalorder %s134, %s135
      %p147 = scmp.eq.s32.totalorder %s31, 1
      %p148 = por %p146, %p147
      %p150 = scmp.ne.s32.totalorder %s135, %s149
      %p151 = scmp.eq.s32.totalorder %s31, 0
      %p152 = por %p150, %p151
      %s154 = sadd.s32 %s153, 1
      %p157 = scmp.eq.s32.totalorder %s25, 1
      %p158 = scmp.ne.s32.totalorder %s153, %s155
      %p159 = scmp.eq.s32.totalorder %s25, 0
      %p160 = por %p158, %p159
      %p161 = scmp.ne.s32.totalorder %s153, %s155
      %p162 = scmp.eq.s32.totalorder %s30, 1
      %p163 = por %p161, %p162
      %p164 = scmp.ne.s32.totalorder %s155, %s156
      %p165 = scmp.eq.s32.totalorder %s30, 0
      %p166 = por %p164, %p165
      %p167 = scmp.ne.s32.totalorder %s155, %s156
      %p168 = scmp.eq.s32.totalorder %s31, 1
      %p169 = por %p167, %p168
      %p171 = scmp.ne.s32.totalorder %s156, %s170
      %p172 = scmp.eq.s32.totalorder %s31, 0
      %p173 = por %p171, %p172
      %s175 = sadd.s32 %s174, 1
      %p178 = scmp.eq.s32.totalorder %s25, 1
      %p179 = scmp.ne.s32.totalorder %s174, %s176
      %p180 = scmp.eq.s32.totalorder %s25, 0
      %p181 = por %p179, %p180
      %p182 = scmp.ne.s32.totalorder %s174, %s176
      %p183 = scmp.eq.s32.totalorder %s30, 1
      %p184 = por %p182, %p183
      %p185 = scmp.ne.s32.totalorder %s176, %s177
      %p186 = scmp.eq.s32.totalorder %s30, 0
      %p187 = por %p185, %p186
      %p188 = scmp.ne.s32.totalorder %s176, %s177
      %p189 = scmp.eq.s32.totalorder %s31, 1
      %p190 = por %p188, %p189
      %p192 = scmp.ne.s32.totalorder %s177, %s191
      %p193 = scmp.eq.s32.totalorder %s31, 0
      %p194 = por %p192, %p193
      %s196 = sadd.s32 %s195, 1
      %p199 = scmp.eq.s32.totalorder %s25, 1
      %p200 = scmp.ne.s32.totalorder %s195, %s197
      %p201 = scmp.eq.s32.totalorder %s25, 0
      %p202 = por %p200, %p201
      %p203 = scmp.ne.s32.totalorder %s195, %s197
      %p204 = scmp.eq.s32.totalorder %s30, 1
      %p205 = por %p203, %p204
      %p206 = scmp.ne.s32.totalorder %s197, %s198
      %p207 = scmp.eq.s32.totalorder %s30, 0
      %p208 = por %p206, %p207
      %p209 = scmp.ne.s32.totalorder %s197, %s198
      %p210 = scmp.eq.s32.totalorder %s31, 1
      %p211 = por %p209, %p210
      %p213 = scmp.ne.s32.totalorder %s198, %s212
      %p214 = scmp.eq.s32.totalorder %s31, 0
      %p215 = por %p213, %p214
      %s217 = sadd.s32 %s216, 1
      %p220 = scmp.eq.s32.totalorder %s25, 1
      %p221 = scmp.ne.s32.totalorder %s216, %s218
      %p222 = scmp.eq.s32.totalorder %s25, 0
      %p223 = por %p221, %p222
      %p224 = scmp.ne.s32.totalorder %s216, %s218
      %p225 = scmp.eq.s32.totalorder %s30, 1
      %p226 = por %p224, %p225
      %p227 = scmp.ne.s32.totalorder %s218, %s219
      %p228 = scmp.eq.s32.totalorder %s30, 0
      %p229 = por %p227, %p228
      %p230 = scmp.ne.s32.totalorder %s218, %s219
      %p231 = scmp.eq.s32.totalorder %s31, 1
      %p232 = por %p230, %p231
      %p234 = scmp.ne.s32.totalorder %s219, %s233
      %p235 = scmp.eq.s32.totalorder %s31, 0
      %p236 = por %p234, %p235
      %s238 = sadd.s32 %s237, 1
      %p241 = scmp.eq.s32.totalorder %s25, 1
      %p242 = scmp.ne.s32.totalorder %s237, %s239
      %p243 = scmp.eq.s32.totalorder %s25, 0
      %p244 = por %p242, %p243
      %p245 = scmp.ne.s32.totalorder %s237, %s239
      %p246 = scmp.eq.s32.totalorder %s30, 1
      %p247 = por %p245, %p246
      %p248 = scmp.ne.s32.totalorder %s239, %s240
      %p249 = scmp.eq.s32.totalorder %s30, 0
      %p250 = por %p248, %p249
      %p251 = scmp.ne.s32.totalorder %s239, %s240
      %p252 = scmp.eq.s32.totalorder %s31, 1
      %p253 = por %p251, %p252
      %p255 = scmp.ne.s32.totalorder %s240, %s254
      %p256 = scmp.eq.s32.totalorder %s31, 0
      %p257 = por %p255, %p256
      %s258 = ssub.s32 %s25, %s32
      %p259 = scmp.eq.s32.totalorder %s258, 0
      %s261 = sadd.s32 %s260, 1
      %s262 = scalar_select %p259, %s260, %s261
      %p265 = pneg %p259
      %p266 = scmp.eq.s32.totalorder %s25, 1
      %p267 = por %p265, %p266
      %p268 = scmp.ne.s32.totalorder %s260, %s263
      %p269 = scmp.eq.s32.totalorder %s25, 0
      %p270 = por %p268, %p269
      %p271 = scmp.ne.s32.totalorder %s260, %s263
      %p272 = scmp.eq.s32.totalorder %s30, 1
      %p273 = por %p271, %p272
      %p274 = scmp.ne.s32.totalorder %s263, %s264
      %p275 = scmp.eq.s32.totalorder %s30, 0
      %p276 = por %p274, %p275
      %p277 = scmp.ne.s32.totalorder %s263, %s264
      %p278 = scmp.eq.s32.totalorder %s31, 1
      %p279 = por %p277, %p278
      %p281 = scmp.ne.s32.totalorder %s264, %s280
      %p282 = scmp.eq.s32.totalorder %s31, 0
      %p283 = por %p281, %p282
      %p284 = scmp.le.s32.totalorder 1, %s25
      %p285 = scmp.lt.s32.totalorder %s25, 3
      %p286 = pnand %p284, %p285
      %p287 = pneg %p286
      // Predicated region
      $region9: #{tpu_custom_call.1} parent=5 // pred_check
        _
      $region10: #{tpu_custom_call.1} parent=5 // pred_check_branch
        %289 = sbr.rel (%p286) target = $region12
      $region11: #{tpu_custom_call.1} parent=5 // pred_region
        %s290 = ssub.s32 %s25, 1
        // Predicated region
        $region13: #{tpu_custom_call.1} parent=11 // pred_check
          %p291 = pneg %p124
        $region14: #{tpu_custom_call.1} parent=11 // pred_check_branch
          %293 = sbr.rel (%p291) target = $region16
        $region15: #{tpu_custom_call.1} parent=11 // pred_region
          _
        $region16: #{tpu_custom_call.1} parent=11 // pred_fallthru
          _
        // Predicated region
        $region17: #{tpu_custom_call.1} parent=11 // pred_check
          %p294 = pneg %p145
        $region18: #{tpu_custom_call.1} parent=11 // pred_check_branch
          %296 = sbr.rel (%p294) target = $region20
        $region19: #{tpu_custom_call.1} parent=11 // pred_region
          _
        $region20: #{tpu_custom_call.1} parent=11 // pred_fallthru
          _
        // Predicated region
        $region21: #{tpu_custom_call.1} parent=11 // pred_check
          %p297 = pneg %p166
        $region22: #{tpu_custom_call.1} parent=11 // pred_check_branch
          %299 = sbr.rel (%p297) target = $region24
        $region23: #{tpu_custom_call.1} parent=11 // pred_region
          %301 = vsyncadd [#allocation6], 0
          %s302 = sshll.u32 %s5, 4
          %s303 = int_to_ptr.hbm [resolvable:$true] %s302
          %s304 = sshll.u32 [#allocation7], 4
          %s305 = int_to_ptr.vmem [resolvable:$true] %s304
          %310 = dma.hbm_to_vmem [thread:$0]  %s303, 256, %s305, [#allocation6], 64, 64, 4
        $region24: #{tpu_custom_call.1} parent=11 // pred_fallthru
          _
        // Predicated region
        $region25: #{tpu_custom_call.1} parent=11 // pred_check
          %p311 = pneg %p187
        $region26: #{tpu_custom_call.1} parent=11 // pred_check_branch
          %313 = sbr.rel (%p311) target = $region28
        $region27: #{tpu_custom_call.1} parent=11 // pred_region
          _
        $region28: #{tpu_custom_call.1} parent=11 // pred_fallthru
          _
        // Predicated region
        $region29: #{tpu_custom_call.1} parent=11 // pred_check
          %p314 = pneg %p208
        $region30: #{tpu_custom_call.1} parent=11 // pred_check_branch
          %316 = sbr.rel (%p314) target = $region32
        $region31: #{tpu_custom_call.1} parent=11 // pred_region
          _
        $region32: #{tpu_custom_call.1} parent=11 // pred_fallthru
          _
        // Predicated region
        $region33: #{tpu_custom_call.1} parent=11 // pred_check
          %p317 = pneg %p229
        $region34: #{tpu_custom_call.1} parent=11 // pred_check_branch
          %319 = sbr.rel (%p317) target = $region36
        $region35: #{tpu_custom_call.1} parent=11 // pred_region
          _
        $region36: #{tpu_custom_call.1} parent=11 // pred_fallthru
          _
        // Predicated region
        $region37: #{tpu_custom_call.1} parent=11 // pred_check
          %p320 = pneg %p250
        $region38: #{tpu_custom_call.1} parent=11 // pred_check_branch
          %322 = sbr.rel (%p320) target = $region40
        $region39: #{tpu_custom_call.1} parent=11 // pred_region
          _
        $region40: #{tpu_custom_call.1} parent=11 // pred_fallthru
          _
      $region12: #{tpu_custom_call.1} parent=5 // pred_fallthru
        _
      %p323 = scmp.lt.s32.totalorder %s25, 2
      // Predicated region
      $region41: #{tpu_custom_call.1} parent=5 // pred_check
        %p324 = pneg %p323
      $region42: #{tpu_custom_call.1} parent=5 // pred_check_branch
        %326 = sbr.rel (%p324) target = $region44
      $region43: #{tpu_custom_call.1} parent=5 // pred_region
        // Predicated region
        $region45: #{tpu_custom_call.1} parent=43 // pred_check
          %p327 = pneg %p45
        $region46: #{tpu_custom_call.1} parent=43 // pred_check_branch
          %329 = sbr.rel (%p327) target = $region48
        $region47: #{tpu_custom_call.1} parent=43 // pred_region
          %s330 = sand.u32 %s35, 1
          %s331 = scalar_lea.sflag [#allocation3], %s330
          %s332 = sand.u32 %s35, 1
          %s333 = smul.addr %s332, 4
          %s334 = scalar_lea.vmem [#allocation2], %s333
          %336 = vsyncadd %s331, 0
          %s337 = smul.addr %s25, 4
          %s338 = scalar_lea.hbm %s0, %s337
          %s340 = sshll.u32 %s338, 4
          %s341 = int_to_ptr.hbm [resolvable:$true] %s340
          %s342 = sshll.u32 %s334, 4
          %s343 = int_to_ptr.vmem [resolvable:$true] %s342
          %345 = dma.hbm_to_vmem [thread:$0]  %s341, 64, %s343, %s331
        $region48: #{tpu_custom_call.1} parent=43 // pred_fallthru
          _
        // Predicated region
        $region49: #{tpu_custom_call.1} parent=43 // pred_check
          %p346 = pneg %p71
        $region50: #{tpu_custom_call.1} parent=43 // pred_check_branch
          %348 = sbr.rel (%p346) target = $region52
        $region51: #{tpu_custom_call.1} parent=43 // pred_region
          %s349 = sand.u32 %s25, 1
          %s350 = scalar_lea.sflag [#allocation6], %s349
          %s351 = sand.u32 %s61, 1
          %s352 = smul.addr %s351, 8
          %s353 = scalar_lea.vmem [#allocation5], %s352
          %355 = vsyncadd %s350, 0
          %s356 = smul.addr %s25, 8
          %s357 = scalar_lea.hbm %s1, %s356
          %s359 = sshll.u32 %s357, 4
          %s360 = int_to_ptr.hbm [resolvable:$true] %s359
          %s361 = sshll.u32 %s353, 4
          %s362 = int_to_ptr.vmem [resolvable:$true] %s361
          %364 = dma.hbm_to_vmem [thread:$0]  %s360, 128, %s362, %s350
        $region52: #{tpu_custom_call.1} parent=43 // pred_fallthru
          _
        // Predicated region
        $region53: #{tpu_custom_call.1} parent=43 // pred_check
          %p365 = pneg %p97
        $region54: #{tpu_custom_call.1} parent=43 // pred_check_branch
          %367 = sbr.rel (%p365) target = $region56
        $region55: #{tpu_custom_call.1} parent=43 // pred_region
          %p368 = scmp.lt.s32.totalorder %s25, 1
          %s369 = scalar_select %p368, %s25, 1
          %s370 = smul.addr %s369, 8
          %s371 = scalar_lea.vmem %s2, %s370
        $region56: #{tpu_custom_call.1} parent=43 // pred_fallthru
          _
      $region44: #{tpu_custom_call.1} parent=5 // pred_fallthru
        _
      %p372 = scmp.le.s32.totalorder 1, %s25
      %p373 = scmp.lt.s32.totalorder %s25, 3
      %p374 = pnand %p372, %p373
      %p375 = pneg %p374
      // Predicated region
      $region57: #{tpu_custom_call.1} parent=5 // pred_check
        _
      $region58: #{tpu_custom_call.1} parent=5 // pred_check_branch
        %377 = sbr.rel (%p374) target = $region60
      $region59: #{tpu_custom_call.1} parent=5 // pred_region
        %s378 = ssub.s32 %s25, 1
        %s379 = sand.u32 %s38, 1
        %s380 = scalar_lea.sflag [#allocation3], %s379
        %s381 = sand.u32 %s38, 1
        %s382 = smul.addr %s381, 4
        %s383 = scalar_lea.vmem [#allocation2], %s382
        // Predicated region
        $region61: #{tpu_custom_call.1} parent=59 // pred_check
          %p384 = pneg %p51
        $region62: #{tpu_custom_call.1} parent=59 // pred_check_branch
          %386 = sbr.rel (%p384) target = $region64
        $region63: #{tpu_custom_call.1} parent=59 // pred_region
          %388 = dma.done %s380, 64
        $region64: #{tpu_custom_call.1} parent=59 // pred_fallthru
          _
        %s389 = sand.u32 %s30, 1
        %s390 = scalar_lea.sflag [#allocation6], %s389
        %s391 = sand.u32 %s64, 1
        %s392 = smul.addr %s391, 8
        %s393 = scalar_lea.vmem [#allocation5], %s392
        // Predicated region
        $region65: #{tpu_custom_call.1} parent=59 // pred_check
          %p394 = pneg %p77
        $region66: #{tpu_custom_call.1} parent=59 // pred_check_branch
          %396 = sbr.rel (%p394) target = $region68
        $region67: #{tpu_custom_call.1} parent=59 // pred_region
          %398 = dma.done %s390, 128
        $region68: #{tpu_custom_call.1} parent=59 // pred_fallthru
          _
        // Predicated region
        $region69: #{tpu_custom_call.1} parent=59 // pred_check
          %p399 = pneg %p166
        $region70: #{tpu_custom_call.1} parent=59 // pred_check_branch
          %401 = sbr.rel (%p399) target = $region72
        $region71: #{tpu_custom_call.1} parent=59 // pred_region
          %403 = dma.done [#allocation6], 256
        $region72: #{tpu_custom_call.1} parent=59 // pred_fallthru
          _
        %s404 = sand.u32 %s38, 1
        %s405 = scalar_lea.sflag [#allocation3], %s404
        %s406 = sand.u32 %s38, 1
        %s407 = smul.addr %s406, 4
        %s408 = scalar_lea.vmem [#allocation2], %s407
        %p409 = pneg %p51
        %p410 = pneg %p48
        %s411 = sand.u32 %s30, 1
        %s412 = scalar_lea.sflag [#allocation6], %s411
        %s413 = sand.u32 %s64, 1
        %s414 = smul.addr %s413, 8
        %s415 = scalar_lea.vmem [#allocation5], %s414
        %p416 = pneg %p77
        %p417 = pneg %p74
        %p418 = scmp.lt.s32.totalorder %s30, 1
        %s419 = scalar_select %p418, %s30, 1
        %s420 = smul.addr %s419, 8
        %s421 = scalar_lea.vmem %s2, %s420
        %p422 = pneg %p103
        %p423 = pneg %p100
        %p424 = pneg %p124
        %p425 = pneg %p121
        %p426 = pneg %p145
        %p427 = pneg %p142
        %p428 = pneg %p166
        %p429 = pneg %p163
        %p430 = pneg %p187
        %p431 = pneg %p184
        %p432 = pneg %p208
        %p433 = pneg %p205
        %p434 = pneg %p229
        %p435 = pneg %p226
        %p436 = pneg %p250
        %p437 = pneg %p247
        %p438 = pneg %p276
        %p439 = pneg %p273
        %s440 = sand.u32 %s263, 1
        %s441 = scalar_lea.sflag [#allocation4], %s440
        %s442 = sand.u32 %s263, 1
        %s443 = smul.addr %s442, 8
        %s444 = scalar_lea.vmem [#allocation8], %s443
        %p445 = scmp.lt.s32.totalorder %s30, 1
        %s446 = scalar_select %p445, %s30, 1
        %s447 = smul.addr %s446, 8
        %s448 = scalar_lea.vmem %s2, %s447
        %v450 = vld [vmem:[%s383] sm:$0xf]
        %v451 = vld [vmem:[%s3] sm:$0xf]
        %v452 = vld [vmem:[%s3 + $0x4] sm:$0xf]
        %v453 = vld [vmem:[%s3 + $0x8] sm:$0xf]
        %v454 = vld [vmem:[%s393] sm:$0xff]
        %v458 = vunpack.c.l.b16 %v451
        %v459 = vunpack.c.l.b16 %v452
        %v460 = vunpack.c.l.b16 %v453
        %v461 = vpack.c.b16 %v459, %v458
        %v462 = vpack.c.b16 %v460, %v460
        %vm464 = vcmask 195584
        %v466 = vsel %vm464, %v450, 0
        %vm468 = vcmask 1043456
        %v470 = vsel %vm468, %v462, 0
        %472 = vmatpush.bf16.msra.mxu0 0
        %473 = vmatpush.bf16.msra.mxu0 0
        %474 = vmatpush.bf16.msra.mxu0 0
        %475 = vmatpush.bf16.msra.mxu0 0
        %476 = vmatpush.bf16.msra.mxu0 0
        %477 = vmatpush.bf16.msra.mxu0 0
        %478 = vmatpush.bf16.msra.mxu0 %v470
        %479 = vmatpush.bf16.msra.mxu0 %v461
        %480 = vmatmul.bf16.gmra.mxu0 %v466
        %v481 = vpop.f32.mrf.mxu0
        %v482 = vadd.f32 %v454, %v481
        %v483 = vpop.f32.mrf.mxu0
        %484 = vdwg.mxu0
        %v485 = vld [vmem:[%s4] sm:$0x1]
        %v487 = vperm.slane %v485, 0
        %v489 = vadd.f32 %v482, %v487
        %v490 = vmax.f32 %v489, 0.0
        %v491 = vpack.c.bf16 %v490, %v490
        %v492 = vld [vmem:[#allocation7] sm:$0xf]
        %v493 = vld [vmem:[#allocation7 + $0x4] sm:$0xf]
        %v494 = vld [vmem:[#allocation7 + $0x8] sm:$0xf]
        %v495 = vld [vmem:[#allocation7 + $0xc] sm:$0xf]
        %v496 = vld [vmem:[%s6] sm:$0x1]
        %v498 = vperm.slane %v496, 0
        %v504 = vunpack.c.l.b16 %v492
        %v505 = vunpack.c.l.b16 %v493
        %v506 = vunpack.c.l.b16 %v494
        %v507 = vunpack.c.l.b16 %v495
        %v508 = vpack.c.b16 %v505, %v504
        %v509 = vpack.c.b16 %v507, %v506
        %vm512 = vcmask 261120
        %v514 = vsel %vm512, %v491, 0
        %516 = vmatpush.bf16.msra.mxu0 0
        %517 = vmatpush.bf16.msra.mxu0 0
        %518 = vmatpush.bf16.msra.mxu0 0
        %519 = vmatpush.bf16.msra.mxu0 0
        %520 = vmatpush.bf16.msra.mxu0 0
        %521 = vmatpush.bf16.msra.mxu0 0
        %522 = vmatpush.bf16.msra.mxu0 %v509
        %523 = vmatpush.bf16.msra.mxu0 %v508
        %524 = vmatmul.bf16.gmra.mxu0 %v514
        %v525 = vpop.f32.mrf.mxu0
        %v526 = vadd.f32 %v498, %v525
        %v527 = vpop.f32.mrf.mxu0
        %528 = vdwg.mxu0
        %v529 = vmax.f32 %v526, 0.0
        %v530 = vpack.c.bf16 %v529, %v529
        %v531 = vld [vmem:[%s7] sm:$0xf]
        %v532 = vld [vmem:[%s7 + $0x4] sm:$0xf]
        %v533 = vld [vmem:[%s7 + $0x8] sm:$0xf]
        %v534 = vld [vmem:[%s7 + $0xc] sm:$0xf]
        %v535 = vld [vmem:[%s8] sm:$0x1]
        %v537 = vperm.slane %v535, 0
        %v543 = vunpack.c.l.b16 %v531
        %v544 = vunpack.c.l.b16 %v532
        %v545 = vunpack.c.l.b16 %v533
        %v546 = vunpack.c.l.b16 %v534
        %v547 = vpack.c.b16 %v544, %v543
        %v548 = vpack.c.b16 %v546, %v545
        %v552 = vsel %vm512, %v530, 0
        %554 = vmatpush.bf16.msra.mxu0 0
        %555 = vmatpush.bf16.msra.mxu0 0
        %556 = vmatpush.bf16.msra.mxu0 0
        %557 = vmatpush.bf16.msra.mxu0 0
        %558 = vmatpush.bf16.msra.mxu0 0
        %559 = vmatpush.bf16.msra.mxu0 0
        %560 = vmatpush.bf16.msra.mxu0 %v548
        %561 = vmatpush.bf16.msra.mxu0 %v547
        %562 = vmatmul.bf16.gmra.mxu0 %v552
        %v563 = vpop.f32.mrf.mxu0
        %v564 = vadd.f32 %v537, %v563
        %v565 = vpop.f32.mrf.mxu0
        %566 = vdwg.mxu0
        %v567 = vld [vmem:[%s448] sm:$0xff]
        %v568 = vlaneseq
        %v569 = vand.u32 %v568, 127
        %v570 = vmul.u32 %v567, 4
        %571 = vset.pattern.permute.xlu0 0
        %572 = vperm.xlu0 %571, %v570
        %v573 = vpop.permute.xlu0 %572
        %vm574 = vcmp.ge.s32.totalorder %v569, %v573
        %v575 = vadd.s32 %v570, 4
        %576 = vset.pattern.permute.xlu0 0
        %577 = vperm.xlu0 %576, %v575
        %v578 = vpop.permute.xlu0 %577
        %vm579 = vcmp.lt.s32.totalorder %v569, %v578
        %vm580 = vmand %vm574, %vm579
        %v581 = vsel %vm580, %v564, 0.0
        %v582 = vld [vmem:[%s9] sm:$0xff]
        %v583 = vld [vmem:[%s9 + $0x8] sm:$0xff]
        %v584 = vld [vmem:[%s9 + $0x10] sm:$0xf]
        %vm585 = vcmask 162816
        %v587 = vsel %vm585, %v581, 0
        %v590 = vsel %vm468, %v584, 0
        %592 = vmatpush.msra.mxu0 0.0
        %593 = vmatpush.msra.mxu0 0.0
        %594 = vmatpush.msra.mxu0 0.0
        %595 = vmatpush.msra.mxu0 0.0
        %596 = vmatpush.msra.mxu0 0.0
        %597 = vmatpush.msra.mxu0 0.0
        %598 = vmatpush.msra.mxu0 0.0
        %599 = vmatpush.msra.mxu0 0.0
        %600 = vmatpush.msra.mxu0 0.0
        %601 = vmatpush.msra.mxu0 0.0
        %602 = vmatpush.msra.mxu0 0.0
        %603 = vmatpush.msra.mxu0 0.0
        %604 = vmatpush.msra.mxu0 0.0
        %605 = vmatpush.msra.mxu0 %v590
        %606 = vmatpush.msra.mxu0 %v583
        %607 = vmatpush.msra.mxu0 %v582
        %608 = vmatmul.f32.gmra.mxu0 %v587
        %v609 = vpop.f32.mrf.mxu0
        %v610 = vadd.f32 0.0, %v609
        %611 = vdwg.mxu0
        %612 = vst [vmem:[%s444] sm:$0xff] %v610
        %s613 = sand.u32 %s263, 1
        %s614 = scalar_lea.sflag [#allocation4], %s613
        %s615 = sand.u32 %s263, 1
        %s616 = smul.addr %s615, 8
        %s617 = scalar_lea.vmem [#allocation8], %s616
        // Predicated region
        $region73: #{tpu_custom_call.1} parent=59 // pred_check
          %p618 = pneg %p273
        $region74: #{tpu_custom_call.1} parent=59 // pred_check_branch
          %620 = sbr.rel (%p618) target = $region76
        $region75: #{tpu_custom_call.1} parent=59 // pred_region
          %622 = vsyncadd %s614, 0
          %s623 = smul.addr %s30, 8
          %s624 = scalar_lea.hbm %s10, %s623
          %s626 = sshll.u32 %s617, 4
          %s627 = int_to_ptr.vmem [resolvable:$true] %s626
          %s628 = sshll.u32 %s624, 4
          %s629 = int_to_ptr.hbm [resolvable:$true] %s628
          %631 = dma.vmem_to_hbm [thread:$0]  %s627, 128, %s629, %s614
        $region76: #{tpu_custom_call.1} parent=59 // pred_fallthru
          _
      $region60: #{tpu_custom_call.1} parent=5 // pred_fallthru
        _
      %p632 = scmp.le.s32.totalorder 2, %s25
      // Predicated region
      $region77: #{tpu_custom_call.1} parent=5 // pred_check
        %p633 = pneg %p632
      $region78: #{tpu_custom_call.1} parent=5 // pred_check_branch
        %635 = sbr.rel (%p633) target = $region80
      $region79: #{tpu_custom_call.1} parent=5 // pred_region
        %s636 = ssub.s32 %s25, 2
        // Predicated region
        $region81: #{tpu_custom_call.1} parent=79 // pred_check
          %p637 = pneg %p279
        $region82: #{tpu_custom_call.1} parent=79 // pred_check_branch
          %639 = sbr.rel (%p637) target = $region84
        $region83: #{tpu_custom_call.1} parent=79 // pred_region
          %s640 = sand.u32 %s264, 1
          %s641 = scalar_lea.sflag [#allocation4], %s640
          %s642 = sand.u32 %s264, 1
          %s643 = smul.addr %s642, 8
          %s644 = scalar_lea.vmem [#allocation8], %s643
          %646 = dma.done %s641, 128
        $region84: #{tpu_custom_call.1} parent=79 // pred_fallthru
          _
      $region80: #{tpu_custom_call.1} parent=5 // pred_fallthru
        _
    $region6: #{tpu_custom_call.1} parent=1 // loop_footer
      %s29 = sadd.s32 1, %s25
    $region7: #{tpu_custom_call.1} parent=1 // loop_footer_branch
      %24 = sbr.rel target = $region3
    $region8: #{tpu_custom_call.1} parent=1 // loop_exit
      _
    %647 = vsyncpa [#allocation3], 1
    %s648 = scalar_lea.sflag [#allocation3], 1
    %649 = vsyncpa %s648, 1
    %650 = vsyncpa [#allocation6], 1
    %s651 = scalar_lea.sflag [#allocation6], 1
    %652 = vsyncpa %s651, 1
    %653 = vsyncpa [#allocation4], 1
    %s654 = scalar_lea.sflag [#allocation4], 1
    %655 = vsyncpa %s654, 1

</llo_original>
